<compile_context>
chip_gen: v7x
topology: tpu7x:2x2x1
jax: 0.10.0
libtpu: 0.0.40
codegen_flags: <defaults>
</compile_context>

<pallas_src>
import functools

import jax
import jax.numpy as jnp
import numpy as np
from jax import lax
from jax.experimental import pallas as pl
from jax.experimental.pallas import tpu as pltpu


# ----------------------------------------------------------------------------
# Kernel 1: NaN-aware per-column (shifted) statistics.
#   Accumulates sum(x - k), sum((x - k)^2), count into (8, C) scratch with pure
#   elementwise VPU adds; one cross-sublane reduce in the finalize only.
# ----------------------------------------------------------------------------
def _stats_kernel(shift_ref, x_ref, stats_ref, acc_s, acc_q, acc_n, *, T, t_tile, C):
    i = pl.program_id(0)

    @pl.when(i == 0)
    def _init():
        acc_s[...] = jnp.zeros_like(acc_s)
        acc_q[...] = jnp.zeros_like(acc_q)
        acc_n[...] = jnp.zeros_like(acc_n)

    x = x_ref[...]                                   # (t_tile, C) f32
    valid = jnp.logical_not(jnp.isnan(x))
    if T % t_tile != 0:
        # Mask out-of-range rows of the (padded) last block.
        rows = i * t_tile + lax.broadcasted_iota(jnp.int32, x.shape, 0)
        valid = jnp.logical_and(valid, rows < T)

    d = x - shift_ref[...]                           # (1, C) broadcast over rows
    dz = jnp.where(valid, d, 0.0)
    d2 = jnp.where(valid, d * d, 0.0)
    cnt = valid.astype(jnp.float32)

    r = t_tile // 8                                  # fold rows onto 8 sublanes
    acc_s[...] += dz.reshape(r, 8, C).sum(axis=0)
    acc_q[...] += d2.reshape(r, 8, C).sum(axis=0)
    acc_n[...] += cnt.reshape(r, 8, C).sum(axis=0)

    @pl.when(i == pl.num_programs(0) - 1)
    def _finalize():
        stats_ref[0:1, :] = jnp.sum(acc_s[...], axis=0, keepdims=True)
        stats_ref[1:2, :] = jnp.sum(acc_q[...], axis=0, keepdims=True)
        stats_ref[2:3, :] = jnp.sum(acc_n[...], axis=0, keepdims=True)


# ----------------------------------------------------------------------------
# Kernel 2: elementwise normalize (single FMA) + NaN fill.
# ----------------------------------------------------------------------------
def _normalize_kernel(scale_ref, bias_ref, x_ref, o_ref):
    y = x_ref[...] * scale_ref[...] + bias_ref[...]
    o_ref[...] = jnp.where(jnp.isnan(y), 0.0, y)


def _choose_t_tile(T, C):
    # ~2 MiB per block: amortizes the ~0.35 us per-grid-step overhead while the
    # ~4 double-buffered blocks of the normalize pass stay well under default
    # scoped VMEM limits (v5e 16 MiB, v6e/v7x 32 MiB).
    rows = (2 * 1024 * 1024) // (C * 4)
    rows = max(8, min(4096, rows))
    rows = min(rows, ((T + 7) // 8) * 8)
    return max(8, (rows // 8) * 8)


@functools.partial(jax.jit, static_argnames=("t_tile",))
def _forward_impl(x, t_tile=None):
    x = x.astype(jnp.float32)
    T, C = x.shape
    assert C % 3 == 0, "channel dim must be 3 * num_landmarks"
    L = C // 3

    if t_tile is None:
        t_tile = _choose_t_tile(T, C)
    t_tile = max(8, (int(t_tile) // 8) * 8)
    nt = pl.cdiv(T, t_tile)

    # Cheap per-channel shift estimate (NaN-aware mean of the first few rows)
    # so the single-pass variance E[(x-k)^2] - E[x-k]^2 does not cancel.
    h = min(T, 64)
    head = x[:h].reshape(h, 3, L)
    hv = jnp.logical_not(jnp.isnan(head))
    k_ch = jnp.where(hv, head, 0.0).sum(axis=(0, 2)) / jnp.maximum(
        hv.sum(axis=(0, 2)).astype(jnp.float32), 1.0)            # (3,)
    shift_col = jnp.repeat(k_ch, L).reshape(1, C)

    stats = pl.pallas_call(
        functools.partial(_stats_kernel, T=T, t_tile=t_tile, C=C),
        out_shape=jax.ShapeDtypeStruct((3, C), jnp.float32),
        grid_spec=pltpu.PrefetchScalarGridSpec(
            num_scalar_prefetch=0,
            grid=(nt,),
            in_specs=[
                pl.BlockSpec((1, C), lambda i: (0, 0)),          # shift (resident)
                pl.BlockSpec((t_tile, C), lambda i: (i, 0)),     # x row-tile
            ],
            out_specs=pl.BlockSpec((3, C), lambda i: (0, 0)),
            scratch_shapes=[pltpu.VMEM((8, C), jnp.float32)] * 3,
        ),
        compiler_params=pltpu.CompilerParams(dimension_semantics=("arbitrary",)),
    )(shift_col, x)

    # Tiny per-channel finalize (3*C floats) in plain XLA.
    s_ch = stats[0].reshape(3, L).sum(axis=1)        # sum(x - k)
    q_ch = stats[1].reshape(3, L).sum(axis=1)        # sum((x - k)^2)
    n_ch = stats[2].reshape(3, L).sum(axis=1)        # count of non-NaN
    m_sh = s_ch / n_ch
    mean_ch = k_ch + m_sh
    var_ch = q_ch / n_ch - m_sh * m_sh               # biased (unbiased=False)
    inv_std = 1.0 / jnp.sqrt(jnp.maximum(var_ch, 0.0))
    scale_col = jnp.repeat(inv_std, L).reshape(1, C)
    bias_col = jnp.repeat(-mean_ch * inv_std, L).reshape(1, C)

    y = pl.pallas_call(
        _normalize_kernel,
        out_shape=jax.ShapeDtypeStruct((T, C), jnp.float32),
        grid_spec=pltpu.PrefetchScalarGridSpec(
            num_scalar_prefetch=0,
            grid=(nt,),
            in_specs=[
                pl.BlockSpec((1, C), lambda i: (0, 0)),          # scale (resident)
                pl.BlockSpec((1, C), lambda i: (0, 0)),          # bias  (resident)
                pl.BlockSpec((t_tile, C), lambda i: (i, 0)),     # x row-tile
            ],
            out_specs=pl.BlockSpec((t_tile, C), lambda i: (i, 0)),
        ),
        compiler_params=pltpu.CompilerParams(dimension_semantics=("parallel",)),
    )(scale_col, bias_col, x)

    # (T, C) channel-blocked -> (T, L, 3): single final XLA transpose.
    return y.reshape(T, 3, L).transpose(0, 2, 1)


def preprocessing_forward(x, filtered_columns=None, t_tile=None):
    """JAX/Pallas equivalent of Preprocessing.forward: (T, 3L) -> (T, L, 3)."""
    if filtered_columns is not None and len(filtered_columns) > 1:
        x = jnp.take(x, jnp.asarray(filtered_columns, dtype=jnp.int32), axis=1)
    return _forward_impl(x, t_tile=t_tile)


# TODO(synk): PyTorch's normalize() relies on NaNs occurring per-whole-landmark
# (its boolean-mask flatten + view(-1, 3) misaligns channels otherwise); this
# implementation computes exact per-channel NaN-excluded stats, which matches
# that intended case.
def _reference(x):
    T, C = x.shape
    L = C // 3
    y = x.reshape(T, 3, L).transpose(0, 2, 1)        # (T, L, 3)
    valid = ~jnp.isnan(y)
    cnt = valid.sum(axis=(0, 1)).astype(jnp.float32)
    xz = jnp.where(valid, y, 0.0)
    mean = xz.sum(axis=(0, 1)) / cnt
    var = jnp.where(valid, (y - mean) ** 2, 0.0).sum(axis=(0, 1)) / cnt
    std = jnp.sqrt(var)
    out = (y - mean) / std
    return jnp.where(jnp.isnan(out), 0.0, out)


if __name__ == "__main__":
    key = jax.random.PRNGKey(0)
    T, L = 100, 16
    C = 3 * L

    k1, k2 = jax.random.split(key)
    base = jax.random.normal(k1, (T, 3, L), dtype=jnp.float32)
    scales = jnp.array([2.0, 0.5, 1.0], jnp.float32).reshape(1, 3, 1)
    offsets = jnp.array([100.0, -50.0, 3.0], jnp.float32).reshape(1, 3, 1)
    x3 = base * scales + offsets
    # Mask out whole landmarks (all 3 coordinate channels) with NaN.
    lm_nan = jax.random.bernoulli(k2, 0.25, (T, L))
    x3 = jnp.where(lm_nan[:, None, :], jnp.nan, x3)
    x = x3.reshape(T, C)                              # columns ordered channel-major

    ref = _reference(x)

    # Default (auto) tiling: large sublane-dense block, single grid step here.
    out = jax.block_until_ready(preprocessing_forward(x))
    assert out.shape == (T, L, 3), out.shape
    np.testing.assert_allclose(np.asarray(out), np.asarray(ref), atol=1e-4, rtol=1e-4)

    # Small forced tile: exercises multi-step accumulation + partial edge block.
    out2 = jax.block_until_ready(_forward_impl(x, t_tile=16))
    np.testing.assert_allclose(np.asarray(out2), np.asarray(ref), atol=1e-4, rtol=1e-4)

    print("KERNEL_OK")
</pallas_src>

<mosaic_0001>
module attributes {stable_mosaic.version = 11 : i64} {
  func.func @_stats_kernel(%arg0: i32, %arg1: memref<1x48xf32, #tpu.memory_space<vmem>>, %arg2: memref<104x48xf32, #tpu.memory_space<vmem>>, %arg3: memref<3x48xf32, #tpu.memory_space<vmem>>, %arg4: memref<8x48xf32, #tpu.memory_space<vmem>>, %arg5: memref<8x48xf32, #tpu.memory_space<vmem>>, %arg6: memref<8x48xf32, #tpu.memory_space<vmem>>) attributes {dimension_semantics = [#tpu.dimension_semantics<arbitrary>], iteration_bounds = array<i64: 1>, scalar_prefetch = 0 : i64, scratch_operands = 3 : i64, tpu.core_type = #tpu.core_type<tc>, window_params = [{pipeline_mode = #tpu.pipeline_mode<synchronous>, transform_indices = @transform_0, window_bounds = array<i64: 1, 48>}, {transform_indices = @transform_1, window_bounds = array<i64: 104, 48>}, {pipeline_mode = #tpu.pipeline_mode<synchronous>, transform_indices = @transform_2, window_bounds = array<i64: 3, 48>}]} {
    %c0_i32 = arith.constant 0 : i32
    %0 = arith.cmpi eq, %arg0, %c0_i32 : i32
    %1 = arith.extui %0 : i1 to i32
    %c0_i32_0 = arith.constant 0 : i32
    %2 = arith.cmpi ne, %1, %c0_i32_0 : i32
    scf.if %2 {
      %cst_23 = arith.constant 0.000000e+00 : f32
      %41 = vector.broadcast %cst_23 : f32 to vector<8x48xf32>
      %c0_24 = arith.constant 0 : index
      %c0_25 = arith.constant 0 : index
      %42 = vector.load %arg4[%c0_24, %c0_25] : memref<8x48xf32, #tpu.memory_space<vmem>>, vector<8x48xf32>
      tpu.vector_store %arg4[%c0_24, %c0_25], %41 {strides = array<i32>} : memref<8x48xf32, #tpu.memory_space<vmem>>, vector<8x48xf32>,
      %cst_26 = arith.constant 0.000000e+00 : f32
      %43 = vector.broadcast %cst_26 : f32 to vector<8x48xf32>
      %c0_27 = arith.constant 0 : index
      %c0_28 = arith.constant 0 : index
      %44 = vector.load %arg5[%c0_27, %c0_28] : memref<8x48xf32, #tpu.memory_space<vmem>>, vector<8x48xf32>
      tpu.vector_store %arg5[%c0_27, %c0_28], %43 {strides = array<i32>} : memref<8x48xf32, #tpu.memory_space<vmem>>, vector<8x48xf32>,
      %cst_29 = arith.constant 0.000000e+00 : f32
      %45 = vector.broadcast %cst_29 : f32 to vector<8x48xf32>
      %c0_30 = arith.constant 0 : index
      %c0_31 = arith.constant 0 : index
      %46 = vector.load %arg6[%c0_30, %c0_31] : memref<8x48xf32, #tpu.memory_space<vmem>>, vector<8x48xf32>
      tpu.vector_store %arg6[%c0_30, %c0_31], %45 {strides = array<i32>} : memref<8x48xf32, #tpu.memory_space<vmem>>, vector<8x48xf32>,
    } else {
    }
    %c0 = arith.constant 0 : index
    %c0_1 = arith.constant 0 : index
    %3 = vector.load %arg2[%c0, %c0_1] : memref<104x48xf32, #tpu.memory_space<vmem>>, vector<104x48xf32>
    %4 = arith.cmpf one, %3, %3 : vector<104x48xf32>
    %cst = arith.constant dense<true> : vector<104x48xi1>
    %5 = arith.xori %4, %cst : vector<104x48xi1>
    %c104_i32 = arith.constant 104 : i32
    %6 = arith.muli %arg0, %c104_i32 : i32
    %7 = tpu.iota {dimensions = array<i32: 0>} : vector<104x48xi32>
    %8 = vector.broadcast %6 : i32 to vector<104x48xi32>
    %9 = arith.addi %8, %7 : vector<104x48xi32>
    %c100_i32 = arith.constant 100 : i32
    %10 = vector.broadcast %c100_i32 : i32 to vector<104x48xi32>
    %11 = arith.cmpi slt, %9, %10 : vector<104x48xi32>
    %12 = arith.andi %5, %11 : vector<104x48xi1>
    %c0_2 = arith.constant 0 : index
    %c0_3 = arith.constant 0 : index
    %13 = vector.load %arg1[%c0_2, %c0_3] : memref<1x48xf32, #tpu.memory_space<vmem>>, vector<1x48xf32>
    %14 = vector.broadcast %13 : vector<1x48xf32> to vector<104x48xf32>
    %15 = arith.subf %3, %14 : vector<104x48xf32>
    %cst_4 = arith.constant 0.000000e+00 : f32
    %16 = vector.broadcast %cst_4 : f32 to vector<104x48xf32>
    %17 = arith.select %12, %15, %16 : vector<104x48xi1>, vector<104x48xf32>
    %18 = arith.mulf %15, %15 : vector<104x48xf32>
    %cst_5 = arith.constant 0.000000e+00 : f32
    %19 = vector.broadcast %cst_5 : f32 to vector<104x48xf32>
    %20 = arith.select %12, %18, %19 : vector<104x48xi1>, vector<104x48xf32>
    %21 = arith.extui %12 : vector<104x48xi1> to vector<104x48xi32>
    %22 = arith.sitofp %21 : vector<104x48xi32> to vector<104x48xf32>
    %c0_6 = arith.constant 0 : index
    %c0_7 = arith.constant 0 : index
    %23 = vector.load %arg4[%c0_6, %c0_7] : memref<8x48xf32, #tpu.memory_space<vmem>>, vector<8x48xf32>
    %24 = vector.shape_cast %17 : vector<104x48xf32> to vector<13x8x48xf32>
    %cst_8 = arith.constant dense<0.000000e+00> : vector<8x48xf32>
    %25 = vector.multi_reduction <add>, %24, %cst_8 [0] : vector<13x8x48xf32> to vector<8x48xf32>
    %26 = arith.addf %23, %25 : vector<8x48xf32>
    %c0_9 = arith.constant 0 : index
    %c0_10 = arith.constant 0 : index
    %27 = vector.load %arg4[%c0_9, %c0_10] : memref<8x48xf32, #tpu.memory_space<vmem>>, vector<8x48xf32>
    tpu.vector_store %arg4[%c0_9, %c0_10], %26 {strides = array<i32>} : memref<8x48xf32, #tpu.memory_space<vmem>>, vector<8x48xf32>,
    %c0_11 = arith.constant 0 : index
    %c0_12 = arith.constant 0 : index
    %28 = vector.load %arg5[%c0_11, %c0_12] : memref<8x48xf32, #tpu.memory_space<vmem>>, vector<8x48xf32>
    %29 = vector.shape_cast %20 : vector<104x48xf32> to vector<13x8x48xf32>
    %cst_13 = arith.constant dense<0.000000e+00> : vector<8x48xf32>
    %30 = vector.multi_reduction <add>, %29, %cst_13 [0] : vector<13x8x48xf32> to vector<8x48xf32>
    %31 = arith.addf %28, %30 : vector<8x48xf32>
    %c0_14 = arith.constant 0 : index
    %c0_15 = arith.constant 0 : index
    %32 = vector.load %arg5[%c0_14, %c0_15] : memref<8x48xf32, #tpu.memory_space<vmem>>, vector<8x48xf32>
    tpu.vector_store %arg5[%c0_14, %c0_15], %31 {strides = array<i32>} : memref<8x48xf32, #tpu.memory_space<vmem>>, vector<8x48xf32>,
    %c0_16 = arith.constant 0 : index
    %c0_17 = arith.constant 0 : index
    %33 = vector.load %arg6[%c0_16, %c0_17] : memref<8x48xf32, #tpu.memory_space<vmem>>, vector<8x48xf32>
    %34 = vector.shape_cast %22 : vector<104x48xf32> to vector<13x8x48xf32>
    %cst_18 = arith.constant dense<0.000000e+00> : vector<8x48xf32>
    %35 = vector.multi_reduction <add>, %34, %cst_18 [0] : vector<13x8x48xf32> to vector<8x48xf32>
    %36 = arith.addf %33, %35 : vector<8x48xf32>
    %c0_19 = arith.constant 0 : index
    %c0_20 = arith.constant 0 : index
    %37 = vector.load %arg6[%c0_19, %c0_20] : memref<8x48xf32, #tpu.memory_space<vmem>>, vector<8x48xf32>
    tpu.vector_store %arg6[%c0_19, %c0_20], %36 {strides = array<i32>} : memref<8x48xf32, #tpu.memory_space<vmem>>, vector<8x48xf32>,
    %c0_i32_21 = arith.constant 0 : i32
    %38 = arith.cmpi eq, %arg0, %c0_i32_21 : i32
    %39 = arith.extui %38 : i1 to i32
    %c0_i32_22 = arith.constant 0 : i32
    %40 = arith.cmpi ne, %39, %c0_i32_22 : i32
    scf.if %40 {
      %c0_23 = arith.constant 0 : index
      %c0_24 = arith.constant 0 : index
      %41 = vector.load %arg4[%c0_23, %c0_24] : memref<8x48xf32, #tpu.memory_space<vmem>>, vector<8x48xf32>
      %cst_25 = arith.constant dense<0.000000e+00> : vector<48xf32>
      %42 = vector.multi_reduction <add>, %41, %cst_25 [0] : vector<8x48xf32> to vector<48xf32>
      %43 = vector.shape_cast %42 : vector<48xf32> to vector<1x48xf32>
      %c0_26 = arith.constant 0 : index
      %c0_27 = arith.constant 0 : index
      %44 = vector.load %arg3[%c0_26, %c0_27] : memref<3x48xf32, #tpu.memory_space<vmem>>, vector<1x48xf32>
      tpu.vector_store %arg3[%c0_26, %c0_27], %43 {strides = array<i32>} : memref<3x48xf32, #tpu.memory_space<vmem>>, vector<1x48xf32>,
      %c0_28 = arith.constant 0 : index
      %c0_29 = arith.constant 0 : index
      %45 = vector.load %arg5[%c0_28, %c0_29] : memref<8x48xf32, #tpu.memory_space<vmem>>, vector<8x48xf32>
      %cst_30 = arith.constant dense<0.000000e+00> : vector<48xf32>
      %46 = vector.multi_reduction <add>, %45, %cst_30 [0] : vector<8x48xf32> to vector<48xf32>
      %47 = vector.shape_cast %46 : vector<48xf32> to vector<1x48xf32>
      %c1 = arith.constant 1 : index
      %c0_31 = arith.constant 0 : index
      %48 = vector.load %arg3[%c1, %c0_31] : memref<3x48xf32, #tpu.memory_space<vmem>>, vector<1x48xf32>
      tpu.vector_store %arg3[%c1, %c0_31], %47 {strides = array<i32>} : memref<3x48xf32, #tpu.memory_space<vmem>>, vector<1x48xf32>,
      %c0_32 = arith.constant 0 : index
      %c0_33 = arith.constant 0 : index
      %49 = vector.load %arg6[%c0_32, %c0_33] : memref<8x48xf32, #tpu.memory_space<vmem>>, vector<8x48xf32>
      %cst_34 = arith.constant dense<0.000000e+00> : vector<48xf32>
      %50 = vector.multi_reduction <add>, %49, %cst_34 [0] : vector<8x48xf32> to vector<48xf32>
      %51 = vector.shape_cast %50 : vector<48xf32> to vector<1x48xf32>
      %c2 = arith.constant 2 : index
      %c0_35 = arith.constant 0 : index
      %52 = vector.load %arg3[%c2, %c0_35] : memref<3x48xf32, #tpu.memory_space<vmem>>, vector<1x48xf32>
      tpu.vector_store %arg3[%c2, %c0_35], %51 {strides = array<i32>} : memref<3x48xf32, #tpu.memory_space<vmem>>, vector<1x48xf32>,
    } else {
    }
    return
  }
  func.func @transform_0(%arg0: i32) -> (i32, i32) {
    %c0_i32 = arith.constant 0 : i32
    %c0_i32_0 = arith.constant 0 : i32
    %c0_i32_1 = arith.constant 0 : i32
    return %c0_i32, %c0_i32_0 : i32, i32
  }
  func.func @transform_1(%arg0: i32) -> (i32, i32) {
    %c0_i32 = arith.constant 0 : i32
    %c0_i32_0 = arith.constant 0 : i32
    return %arg0, %c0_i32 : i32, i32
  }
  func.func @transform_2(%arg0: i32) -> (i32, i32) {
    %c0_i32 = arith.constant 0 : i32
    %c0_i32_0 = arith.constant 0 : i32
    %c0_i32_1 = arith.constant 0 : i32
    return %c0_i32, %c0_i32_0 : i32, i32
  }
}

module attributes {stable_mosaic.version = 11 : i64} {
  func.func @_normalize_kernel(%arg0: i32, %arg1: memref<1x48xf32, #tpu.memory_space<vmem>>, %arg2: memref<1x48xf32, #tpu.memory_space<vmem>>, %arg3: memref<104x48xf32, #tpu.memory_space<vmem>>, %arg4: memref<104x48xf32, #tpu.memory_space<vmem>>) attributes {dimension_semantics = [#tpu.dimension_semantics<parallel>], iteration_bounds = array<i64: 1>, scalar_prefetch = 0 : i64, scratch_operands = 0 : i64, tpu.core_type = #tpu.core_type<tc>, window_params = [{pipeline_mode = #tpu.pipeline_mode<synchronous>, transform_indices = @transform_0, window_bounds = array<i64: 1, 48>}, {pipeline_mode = #tpu.pipeline_mode<synchronous>, transform_indices = @transform_1, window_bounds = array<i64: 1, 48>}, {transform_indices = @transform_2, window_bounds = array<i64: 104, 48>}, {transform_indices = @transform_3, window_bounds = array<i64: 104, 48>}]} {
    %c0 = arith.constant 0 : index
    %c0_0 = arith.constant 0 : index
    %0 = vector.load %arg3[%c0, %c0_0] : memref<104x48xf32, #tpu.memory_space<vmem>>, vector<104x48xf32>
    %c0_1 = arith.constant 0 : index
    %c0_2 = arith.constant 0 : index
    %1 = vector.load %arg1[%c0_1, %c0_2] : memref<1x48xf32, #tpu.memory_space<vmem>>, vector<1x48xf32>
    %2 = vector.broadcast %1 : vector<1x48xf32> to vector<104x48xf32>
    %3 = arith.mulf %0, %2 : vector<104x48xf32>
    %c0_3 = arith.constant 0 : index
    %c0_4 = arith.constant 0 : index
    %4 = vector.load %arg2[%c0_3, %c0_4] : memref<1x48xf32, #tpu.memory_space<vmem>>, vector<1x48xf32>
    %5 = vector.broadcast %4 : vector<1x48xf32> to vector<104x48xf32>
    %6 = arith.addf %3, %5 : vector<104x48xf32>
    %7 = arith.cmpf one, %6, %6 : vector<104x48xf32>
    %cst = arith.constant 0.000000e+00 : f32
    %8 = vector.broadcast %cst : f32 to vector<104x48xf32>
    %9 = arith.select %7, %8, %6 : vector<104x48xi1>, vector<104x48xf32>
    %c0_5 = arith.constant 0 : index
    %c0_6 = arith.constant 0 : index
    %10 = vector.load %arg4[%c0_5, %c0_6] : memref<104x48xf32, #tpu.memory_space<vmem>>, vector<104x48xf32>
    tpu.vector_store %arg4[%c0_5, %c0_6], %9 {strides = array<i32>} : memref<104x48xf32, #tpu.memory_space<vmem>>, vector<104x48xf32>,
    return
  }
  func.func @transform_0(%arg0: i32) -> (i32, i32) {
    %c0_i32 = arith.constant 0 : i32
    %c0_i32_0 = arith.constant 0 : i32
    %c0_i32_1 = arith.constant 0 : i32
    return %c0_i32, %c0_i32_0 : i32, i32
  }
  func.func @transform_1(%arg0: i32) -> (i32, i32) {
    %c0_i32 = arith.constant 0 : i32
    %c0_i32_0 = arith.constant 0 : i32
    %c0_i32_1 = arith.constant 0 : i32
    return %c0_i32, %c0_i32_0 : i32, i32
  }
  func.func @transform_2(%arg0: i32) -> (i32, i32) {
    %c0_i32 = arith.constant 0 : i32
    %c0_i32_0 = arith.constant 0 : i32
    return %arg0, %c0_i32 : i32, i32
  }
  func.func @transform_3(%arg0: i32) -> (i32, i32) {
    %c0_i32 = arith.constant 0 : i32
    %c0_i32_0 = arith.constant 0 : i32
    return %arg0, %c0_i32 : i32, i32
  }
}

</mosaic_0001>

<llo_original>
// kernel: _forward_impl.3
$region0: #{_forward_impl.3}
  #allocation0 [shape = 'u32[]', space=smem, size = 0x4, offset = 0x4, fixed_abs, tag = 'smem constant byte address 0x4 - core index']
  #allocation1 [shape = 'u32[144,128]{1,0:T(1,128)}', space=vmem, size = 0x12000, scoped, tag = 'internal scratch']
  %s0 = inlined_call_operand.vmem [shape: f32[1,48], index: 0, kind: input, shape index: {}]
  %s1 = inlined_call_operand.vmem [shape: f32[1,48], index: 1, kind: input, shape index: {}]
  %s2 = inlined_call_operand.vmem [shape: f32[100,48], index: 2, kind: input, shape index: {}]
  %s3 = inlined_call_operand.vmem [shape: f32[100,48], index: 3, kind: output, shape index: {}]
  %s4 = sld [smem:[#allocation0]]
  $region22: #{_forward_impl.3} parent=0
    _
  %s6 = ssub.s32 1, %s4
  %s7 = scalar_select 0, %s6, %s4
  // Predicated region
  $region2: #{_forward_impl.3} parent=0 // pred_check
    _
  $region3: #{_forward_impl.3} parent=0 // pred_check_branch
    %9 = sbr.rel (0) target = $region5
  $region4: #{_forward_impl.3} parent=0 // pred_region
    _
  $region5: #{_forward_impl.3} parent=0 // pred_fallthru
    _
  // Predicated region
  $region6: #{_forward_impl.3} parent=0 // pred_check
    _
  $region7: #{_forward_impl.3} parent=0 // pred_check_branch
    %11 = sbr.rel (0) target = $region9
  $region8: #{_forward_impl.3} parent=0 // pred_region
    _
  $region9: #{_forward_impl.3} parent=0 // pred_fallthru
    _
  // Predicated region
  $region10: #{_forward_impl.3} parent=0 // pred_check
    _
  $region11: #{_forward_impl.3} parent=0 // pred_check_branch
    %13 = sbr.rel (0) target = $region13
  $region12: #{_forward_impl.3} parent=0 // pred_region
    _
  $region13: #{_forward_impl.3} parent=0 // pred_fallthru
    _
  %v14 = vld [vmem:[%s2] sm:$0xff]
  %v15 = vld [vmem:[%s2 + $0x8] sm:$0xff]
  %v16 = vld [vmem:[%s2 + $0x10] sm:$0xff]
  %v17 = vld [vmem:[%s2 + $0x18] sm:$0xff]
  %v18 = vld [vmem:[%s2 + $0x20] sm:$0xff]
  %v19 = vld [vmem:[%s2 + $0x28] sm:$0xff]
  %v20 = vld [vmem:[%s2 + $0x30] sm:$0xff]
  %v21 = vld [vmem:[%s2 + $0x38] sm:$0xff]
  %v22 = vld [vmem:[%s2 + $0x40] sm:$0xff]
  %v23 = vld [vmem:[%s2 + $0x48] sm:$0xff]
  %v24 = vld [vmem:[%s2 + $0x50] sm:$0xff]
  %v25 = vld [vmem:[%s2 + $0x58] sm:$0xff]
  %v26 = vld [vmem:[%s2 + $0x60] sm:$0xff]
  %v27 = vld [vmem:[%s0] sm:$0x1]
  %v29 = vlaneseq
  %v30 = vshrl.u32 %v29, 7
  %v31 = vsub.s32 0, %v30
  %v32 = vrot.slane %v27, %v31
  %v34 = vmul.f32 %v14, %v32
  %v35 = vmul.f32 %v15, %v32
  %v36 = vmul.f32 %v16, %v32
  %v37 = vmul.f32 %v17, %v32
  %v38 = vmul.f32 %v18, %v32
  %v39 = vmul.f32 %v19, %v32
  %v40 = vmul.f32 %v20, %v32
  %v41 = vmul.f32 %v21, %v32
  %v42 = vmul.f32 %v22, %v32
  %v43 = vmul.f32 %v23, %v32
  %v44 = vmul.f32 %v24, %v32
  %v45 = vmul.f32 %v25, %v32
  %v46 = vmul.f32 %v26, %v32
  %v47 = vld [vmem:[%s1] sm:$0x1]
  %v49 = vlaneseq
  %v50 = vshrl.u32 %v49, 7
  %v51 = vsub.s32 0, %v50
  %v52 = vrot.slane %v47, %v51
  %v54 = vadd.f32 %v34, %v52
  %v55 = vadd.f32 %v35, %v52
  %v56 = vadd.f32 %v36, %v52
  %v57 = vadd.f32 %v37, %v52
  %v58 = vadd.f32 %v38, %v52
  %v59 = vadd.f32 %v39, %v52
  %v60 = vadd.f32 %v40, %v52
  %v61 = vadd.f32 %v41, %v52
  %v62 = vadd.f32 %v42, %v52
  %v63 = vadd.f32 %v43, %v52
  %v64 = vadd.f32 %v44, %v52
  %v65 = vadd.f32 %v45, %v52
  %v66 = vadd.f32 %v46, %v52
  %vm67 = vcmp.ne.f32.partialorder %v54, %v54
  %vm68 = vcmp.ne.f32.partialorder %v55, %v55
  %vm69 = vcmp.ne.f32.partialorder %v56, %v56
  %vm70 = vcmp.ne.f32.partialorder %v57, %v57
  %vm71 = vcmp.ne.f32.partialorder %v58, %v58
  %vm72 = vcmp.ne.f32.partialorder %v59, %v59
  %vm73 = vcmp.ne.f32.partialorder %v60, %v60
  %vm74 = vcmp.ne.f32.partialorder %v61, %v61
  %vm75 = vcmp.ne.f32.partialorder %v62, %v62
  %vm76 = vcmp.ne.f32.partialorder %v63, %v63
  %vm77 = vcmp.ne.f32.partialorder %v64, %v64
  %vm78 = vcmp.ne.f32.partialorder %v65, %v65
  %vm79 = vcmp.ne.f32.partialorder %v66, %v66
  %v80 = vsel %vm67, 0.0, %v54
  %v81 = vsel %vm68, 0.0, %v55
  %v82 = vsel %vm69, 0.0, %v56
  %v83 = vsel %vm70, 0.0, %v57
  %v84 = vsel %vm71, 0.0, %v58
  %v85 = vsel %vm72, 0.0, %v59
  %v86 = vsel %vm73, 0.0, %v60
  %v87 = vsel %vm74, 0.0, %v61
  %v88 = vsel %vm75, 0.0, %v62
  %v89 = vsel %vm76, 0.0, %v63
  %v90 = vsel %vm77, 0.0, %v64
  %v91 = vsel %vm78, 0.0, %v65
  %v92 = vsel %vm79, 0.0, %v66
  %vm93 = vcmask 392192
  %94 = vst.msk [vmem:[%s3] sm:$0xff] %vm93, %v80
  %95 = vst.msk [vmem:[%s3 + $0x8] sm:$0xff] %vm93, %v81
  %96 = vst.msk [vmem:[%s3 + $0x10] sm:$0xff] %vm93, %v82
  %97 = vst.msk [vmem:[%s3 + $0x18] sm:$0xff] %vm93, %v83
  %98 = vst.msk [vmem:[%s3 + $0x20] sm:$0xff] %vm93, %v84
  %99 = vst.msk [vmem:[%s3 + $0x28] sm:$0xff] %vm93, %v85
  %100 = vst.msk [vmem:[%s3 + $0x30] sm:$0xff] %vm93, %v86
  %101 = vst.msk [vmem:[%s3 + $0x38] sm:$0xff] %vm93, %v87
  %102 = vst.msk [vmem:[%s3 + $0x40] sm:$0xff] %vm93, %v88
  %103 = vst.msk [vmem:[%s3 + $0x48] sm:$0xff] %vm93, %v89
  %104 = vst.msk [vmem:[%s3 + $0x50] sm:$0xff] %vm93, %v90
  %105 = vst.msk [vmem:[%s3 + $0x58] sm:$0xff] %vm93, %v91
  %106 = vst.msk [vmem:[%s3 + $0x60] sm:$0xff] %vm93, %v92
  // Predicated region
  $region14: #{_forward_impl.3} parent=0 // pred_check
    _
  $region15: #{_forward_impl.3} parent=0 // pred_check_branch
    %108 = sbr.rel (0) target = $region17
  $region16: #{_forward_impl.3} parent=0 // pred_region
    _
  $region17: #{_forward_impl.3} parent=0 // pred_fallthru
    _
  // Predicated region
  $region18: #{_forward_impl.3} parent=0 // pred_check
    _
  $region19: #{_forward_impl.3} parent=0 // pred_check_branch
    %110 = sbr.rel (0) target = $region21
  $region20: #{_forward_impl.3} parent=0 // pred_region
    _
  $region21: #{_forward_impl.3} parent=0 // pred_fallthru
    _

// kernel: _forward_impl.2
$region0: #{_forward_impl.2}
  #allocation0 [shape = 'u32[]', space=smem, size = 0x4, offset = 0x4, fixed_abs, tag = 'smem constant byte address 0x4 - core index']
  #allocation1 [shape = 'u32[144,128]{1,0:T(1,128)}', space=vmem, size = 0x12000, scoped, tag = 'internal scratch']
  #allocation2 [shape = 'f32[8,48]{1,0:T(8,128)}', space=vmem, size = 0x1000, scoped, tag = 'scratch operand']
  #allocation3 [shape = 'f32[8,48]{1,0:T(8,128)}', space=vmem, size = 0x1000, scoped, tag = 'scratch operand']
  #allocation4 [shape = 'f32[8,48]{1,0:T(8,128)}', space=vmem, size = 0x1000, scoped, tag = 'scratch operand']
  %s0 = inlined_call_operand.vmem [shape: f32[1,48], index: 0, kind: input, shape index: {}]
  %s1 = inlined_call_operand.vmem [shape: f32[100,48], index: 1, kind: input, shape index: {}]
  %s2 = inlined_call_operand.vmem [shape: f32[3,48], index: 2, kind: output, shape index: {}]
  %s3 = sld [smem:[#allocation0]]
  $region26: #{_forward_impl.2} parent=0
    _
  %s5 = ssub.s32 1, %s3
  %s6 = scalar_select 0, %s5, %s3
  // Predicated region
  $region2: #{_forward_impl.2} parent=0 // pred_check
    _
  $region3: #{_forward_impl.2} parent=0 // pred_check_branch
    %8 = sbr.rel (0) target = $region5
  $region4: #{_forward_impl.2} parent=0 // pred_region
    _
  $region5: #{_forward_impl.2} parent=0 // pred_fallthru
    _
  // Predicated region
  $region6: #{_forward_impl.2} parent=0 // pred_check
    _
  $region7: #{_forward_impl.2} parent=0 // pred_check_branch
    %10 = sbr.rel (0) target = $region9
  $region8: #{_forward_impl.2} parent=0 // pred_region
    _
  $region9: #{_forward_impl.2} parent=0 // pred_fallthru
    _
  %p11 = scmp.eq.s32.totalorder 0, 0
  // Predicated region
  $region10: #{_forward_impl.2} parent=0 // pred_check
    %p12 = pneg %p11
  $region11: #{_forward_impl.2} parent=0 // pred_check_branch
    %14 = sbr.rel (%p12) target = $region13
  $region12: #{_forward_impl.2} parent=0 // pred_region
    %vm15 = vcmask 392192
    %16 = vst.msk [vmem:[#allocation2] sm:$0xff] %vm15, 0.0
    %17 = vst.msk [vmem:[#allocation3] sm:$0xff] %vm15, 0.0
    %18 = vst.msk [vmem:[#allocation4] sm:$0xff] %vm15, 0.0
  $region13: #{_forward_impl.2} parent=0 // pred_fallthru
    _
  %v19 = vld [vmem:[%s1] sm:$0xff]
  %v20 = vld [vmem:[%s1 + $0x8] sm:$0xff]
  %v21 = vld [vmem:[%s1 + $0x10] sm:$0xff]
  %v22 = vld [vmem:[%s1 + $0x18] sm:$0xff]
  %v23 = vld [vmem:[%s1 + $0x20] sm:$0xff]
  %v24 = vld [vmem:[%s1 + $0x28] sm:$0xff]
  %v25 = vld [vmem:[%s1 + $0x30] sm:$0xff]
  %v26 = vld [vmem:[%s1 + $0x38] sm:$0xff]
  %v27 = vld [vmem:[%s1 + $0x40] sm:$0xff]
  %v28 = vld [vmem:[%s1 + $0x48] sm:$0xff]
  %v29 = vld [vmem:[%s1 + $0x50] sm:$0xff]
  %v30 = vld [vmem:[%s1 + $0x58] sm:$0xff]
  %v31 = vld [vmem:[%s1 + $0x60] sm:$0xff]
  %vm32 = vcmp.ne.f32.partialorder %v19, %v19
  %vm33 = vcmp.ne.f32.partialorder %v20, %v20
  %vm34 = vcmp.ne.f32.partialorder %v21, %v21
  %vm35 = vcmp.ne.f32.partialorder %v22, %v22
  %vm36 = vcmp.ne.f32.partialorder %v23, %v23
  %vm37 = vcmp.ne.f32.partialorder %v24, %v24
  %vm38 = vcmp.ne.f32.partialorder %v25, %v25
  %vm39 = vcmp.ne.f32.partialorder %v26, %v26
  %vm40 = vcmp.ne.f32.partialorder %v27, %v27
  %vm41 = vcmp.ne.f32.partialorder %v28, %v28
  %vm42 = vcmp.ne.f32.partialorder %v29, %v29
  %vm43 = vcmp.ne.f32.partialorder %v30, %v30
  %vm44 = vcmp.ne.f32.partialorder %v31, %v31
  %vm45 = vmxor %vm32, 1
  %vm46 = vmxor %vm33, 1
  %vm47 = vmxor %vm34, 1
  %vm48 = vmxor %vm35, 1
  %vm49 = vmxor %vm36, 1
  %vm50 = vmxor %vm37, 1
  %vm51 = vmxor %vm38, 1
  %vm52 = vmxor %vm39, 1
  %vm53 = vmxor %vm40, 1
  %vm54 = vmxor %vm41, 1
  %vm55 = vmxor %vm42, 1
  %vm56 = vmxor %vm43, 1
  %vm57 = vmxor %vm44, 1
  %s58 = smul.u32 0, 104
  %v59 = vlaneseq
  %v60 = vshrl.u32 %v59, 7
  %v61 = vadd.s32 %v60, 8
  %v62 = vadd.s32 %v60, 16
  %v63 = vadd.s32 %v60, 24
  %v64 = vadd.s32 %v60, 32
  %v65 = vadd.s32 %v60, 40
  %v66 = vadd.s32 %v60, 48
  %v67 = vadd.s32 %v60, 56
  %v68 = vadd.s32 %v60, 64
  %v69 = vadd.s32 %v60, 72
  %v70 = vadd.s32 %v60, 80
  %v71 = vadd.s32 %v60, 88
  %v72 = vadd.s32 %v60, 96
  %v73 = vstv %s58
  %v74 = vadd.s32 %v73, %v60
  %v75 = vadd.s32 %v73, %v61
  %v76 = vadd.s32 %v73, %v62
  %v77 = vadd.s32 %v73, %v63
  %v78 = vadd.s32 %v73, %v64
  %v79 = vadd.s32 %v73, %v65
  %v80 = vadd.s32 %v73, %v66
  %v81 = vadd.s32 %v73, %v67
  %v82 = vadd.s32 %v73, %v68
  %v83 = vadd.s32 %v73, %v69
  %v84 = vadd.s32 %v73, %v70
  %v85 = vadd.s32 %v73, %v71
  %v86 = vadd.s32 %v73, %v72
  %vm87 = vcmp.lt.s32.totalorder %v74, 100
  %vm88 = vcmp.lt.s32.totalorder %v75, 100
  %vm89 = vcmp.lt.s32.totalorder %v76, 100
  %vm90 = vcmp.lt.s32.totalorder %v77, 100
  %vm91 = vcmp.lt.s32.totalorder %v78, 100
  %vm92 = vcmp.lt.s32.totalorder %v79, 100
  %vm93 = vcmp.lt.s32.totalorder %v80, 100
  %vm94 = vcmp.lt.s32.totalorder %v81, 100
  %vm95 = vcmp.lt.s32.totalorder %v82, 100
  %vm96 = vcmp.lt.s32.totalorder %v83, 100
  %vm97 = vcmp.lt.s32.totalorder %v84, 100
  %vm98 = vcmp.lt.s32.totalorder %v85, 100
  %vm99 = vcmp.lt.s32.totalorder %v86, 100
  %vm100 = vmand %vm45, %vm87
  %vm101 = vmand %vm46, %vm88
  %vm102 = vmand %vm47, %vm89
  %vm103 = vmand %vm48, %vm90
  %vm104 = vmand %vm49, %vm91
  %vm105 = vmand %vm50, %vm92
  %vm106 = vmand %vm51, %vm93
  %vm107 = vmand %vm52, %vm94
  %vm108 = vmand %vm53, %vm95
  %vm109 = vmand %vm54, %vm96
  %vm110 = vmand %vm55, %vm97
  %vm111 = vmand %vm56, %vm98
  %vm112 = vmand %vm57, %vm99
  %v113 = vld [vmem:[%s0] sm:$0x1]
  %v115 = vlaneseq
  %v116 = vshrl.u32 %v115, 7
  %v117 = vsub.s32 0, %v116
  %v118 = vrot.slane %v113, %v117
  %v120 = vsub.f32 %v19, %v118
  %v121 = vsub.f32 %v20, %v118
  %v122 = vsub.f32 %v21, %v118
  %v123 = vsub.f32 %v22, %v118
  %v124 = vsub.f32 %v23, %v118
  %v125 = vsub.f32 %v24, %v118
  %v126 = vsub.f32 %v25, %v118
  %v127 = vsub.f32 %v26, %v118
  %v128 = vsub.f32 %v27, %v118
  %v129 = vsub.f32 %v28, %v118
  %v130 = vsub.f32 %v29, %v118
  %v131 = vsub.f32 %v30, %v118
  %v132 = vsub.f32 %v31, %v118
  %v133 = vsel %vm100, %v120, 0.0
  %v134 = vsel %vm101, %v121, 0.0
  %v135 = vsel %vm102, %v122, 0.0
  %v136 = vsel %vm103, %v123, 0.0
  %v137 = vsel %vm104, %v124, 0.0
  %v138 = vsel %vm105, %v125, 0.0
  %v139 = vsel %vm106, %v126, 0.0
  %v140 = vsel %vm107, %v127, 0.0
  %v141 = vsel %vm108, %v128, 0.0
  %v142 = vsel %vm109, %v129, 0.0
  %v143 = vsel %vm110, %v130, 0.0
  %v144 = vsel %vm111, %v131, 0.0
  %v145 = vsel %vm112, %v132, 0.0
  %v146 = vmul.f32 %v120, %v120
  %v147 = vmul.f32 %v121, %v121
  %v148 = vmul.f32 %v122, %v122
  %v149 = vmul.f32 %v123, %v123
  %v150 = vmul.f32 %v124, %v124
  %v151 = vmul.f32 %v125, %v125
  %v152 = vmul.f32 %v126, %v126
  %v153 = vmul.f32 %v127, %v127
  %v154 = vmul.f32 %v128, %v128
  %v155 = vmul.f32 %v129, %v129
  %v156 = vmul.f32 %v130, %v130
  %v157 = vmul.f32 %v131, %v131
  %v158 = vmul.f32 %v132, %v132
  %v159 = vsel %vm100, %v146, 0.0
  %v160 = vsel %vm101, %v147, 0.0
  %v161 = vsel %vm102, %v148, 0.0
  %v162 = vsel %vm103, %v149, 0.0
  %v163 = vsel %vm104, %v150, 0.0
  %v164 = vsel %vm105, %v151, 0.0
  %v165 = vsel %vm106, %v152, 0.0
  %v166 = vsel %vm107, %v153, 0.0
  %v167 = vsel %vm108, %v154, 0.0
  %v168 = vsel %vm109, %v155, 0.0
  %v169 = vsel %vm110, %v156, 0.0
  %v170 = vsel %vm111, %v157, 0.0
  %v171 = vsel %vm112, %v158, 0.0
  %v172 = vsel %vm100, 1, 0
  %v173 = vsel %vm101, 1, 0
  %v174 = vsel %vm102, 1, 0
  %v175 = vsel %vm103, 1, 0
  %v176 = vsel %vm104, 1, 0
  %v177 = vsel %vm105, 1, 0
  %v178 = vsel %vm106, 1, 0
  %v179 = vsel %vm107, 1, 0
  %v180 = vsel %vm108, 1, 0
  %v181 = vsel %vm109, 1, 0
  %v182 = vsel %vm110, 1, 0
  %v183 = vsel %vm111, 1, 0
  %v184 = vsel %vm112, 1, 0
  %v185 = vcvt.s32.f32 %v172
  %v186 = vcvt.s32.f32 %v173
  %v187 = vcvt.s32.f32 %v174
  %v188 = vcvt.s32.f32 %v175
  %v189 = vcvt.s32.f32 %v176
  %v190 = vcvt.s32.f32 %v177
  %v191 = vcvt.s32.f32 %v178
  %v192 = vcvt.s32.f32 %v179
  %v193 = vcvt.s32.f32 %v180
  %v194 = vcvt.s32.f32 %v181
  %v195 = vcvt.s32.f32 %v182
  %v196 = vcvt.s32.f32 %v183
  %v197 = vcvt.s32.f32 %v184
  %v198 = vld [vmem:[#allocation2] sm:$0xff]
  %vm199 = vcmask 392192
  %v200 = vsel %vm199, %v133, 0.0
  %v201 = vsel %vm199, %v134, 0.0
  %v202 = vadd.f32 %v200, %v201
  %v203 = vsel %vm199, %v135, 0.0
  %v204 = vadd.f32 %v202, %v203
  %v205 = vsel %vm199, %v136, 0.0
  %v206 = vadd.f32 %v204, %v205
  %v207 = vsel %vm199, %v137, 0.0
  %v208 = vadd.f32 %v206, %v207
  %v209 = vsel %vm199, %v138, 0.0
  %v210 = vadd.f32 %v208, %v209
  %v211 = vsel %vm199, %v139, 0.0
  %v212 = vadd.f32 %v210, %v211
  %v213 = vsel %vm199, %v140, 0.0
  %v214 = vadd.f32 %v212, %v213
  %v215 = vsel %vm199, %v141, 0.0
  %v216 = vadd.f32 %v214, %v215
  %v217 = vsel %vm199, %v142, 0.0
  %v218 = vadd.f32 %v216, %v217
  %v219 = vsel %vm199, %v143, 0.0
  %v220 = vadd.f32 %v218, %v219
  %v221 = vsel %vm199, %v144, 0.0
  %v222 = vadd.f32 %v220, %v221
  %v223 = vsel %vm199, %v145, 0.0
  %v224 = vadd.f32 %v222, %v223
  %v225 = vadd.f32 %v198, %v224
  %226 = vst.msk [vmem:[#allocation2] sm:$0xff] %vm199, %v225
  %v227 = vld [vmem:[#allocation3] sm:$0xff]
  %v228 = vsel %vm199, %v159, 0.0
  %v229 = vsel %vm199, %v160, 0.0
  %v230 = vadd.f32 %v228, %v229
  %v231 = vsel %vm199, %v161, 0.0
  %v232 = vadd.f32 %v230, %v231
  %v233 = vsel %vm199, %v162, 0.0
  %v234 = vadd.f32 %v232, %v233
  %v235 = vsel %vm199, %v163, 0.0
  %v236 = vadd.f32 %v234, %v235
  %v237 = vsel %vm199, %v164, 0.0
  %v238 = vadd.f32 %v236, %v237
  %v239 = vsel %vm199, %v165, 0.0
  %v240 = vadd.f32 %v238, %v239
  %v241 = vsel %vm199, %v166, 0.0
  %v242 = vadd.f32 %v240, %v241
  %v243 = vsel %vm199, %v167, 0.0
  %v244 = vadd.f32 %v242, %v243
  %v245 = vsel %vm199, %v168, 0.0
  %v246 = vadd.f32 %v244, %v245
  %v247 = vsel %vm199, %v169, 0.0
  %v248 = vadd.f32 %v246, %v247
  %v249 = vsel %vm199, %v170, 0.0
  %v250 = vadd.f32 %v248, %v249
  %v251 = vsel %vm199, %v171, 0.0
  %v252 = vadd.f32 %v250, %v251
  %v253 = vadd.f32 %v227, %v252
  %254 = vst.msk [vmem:[#allocation3] sm:$0xff] %vm199, %v253
  %v255 = vld [vmem:[#allocation4] sm:$0xff]
  %v256 = vsel %vm199, %v185, 0.0
  %v257 = vsel %vm199, %v186, 0.0
  %v258 = vadd.f32 %v256, %v257
  %v259 = vsel %vm199, %v187, 0.0
  %v260 = vadd.f32 %v258, %v259
  %v261 = vsel %vm199, %v188, 0.0
  %v262 = vadd.f32 %v260, %v261
  %v263 = vsel %vm199, %v189, 0.0
  %v264 = vadd.f32 %v262, %v263
  %v265 = vsel %vm199, %v190, 0.0
  %v266 = vadd.f32 %v264, %v265
  %v267 = vsel %vm199, %v191, 0.0
  %v268 = vadd.f32 %v266, %v267
  %v269 = vsel %vm199, %v192, 0.0
  %v270 = vadd.f32 %v268, %v269
  %v271 = vsel %vm199, %v193, 0.0
  %v272 = vadd.f32 %v270, %v271
  %v273 = vsel %vm199, %v194, 0.0
  %v274 = vadd.f32 %v272, %v273
  %v275 = vsel %vm199, %v195, 0.0
  %v276 = vadd.f32 %v274, %v275
  %v277 = vsel %vm199, %v196, 0.0
  %v278 = vadd.f32 %v276, %v277
  %v279 = vsel %vm199, %v197, 0.0
  %v280 = vadd.f32 %v278, %v279
  %v281 = vadd.f32 %v255, %v280
  %282 = vst.msk [vmem:[#allocation4] sm:$0xff] %vm199, %v281
  // Predicated region
  $region14: #{_forward_impl.2} parent=0 // pred_check
    %p283 = pneg %p11
  $region15: #{_forward_impl.2} parent=0 // pred_check_branch
    %285 = sbr.rel (%p283) target = $region17
  $region16: #{_forward_impl.2} parent=0 // pred_region
    %v286 = vld [vmem:[#allocation2] sm:$0xff]
    %v287 = vsel %vm199, %v286, 0.0
    %v288 = vrot.slane %v287, 4
    %v289 = vadd.f32 %v287, %v288
    %v290 = vrot.slane %v289, 2
    %v291 = vadd.f32 %v289, %v290
    %v292 = vrot.slane %v291, 1
    %v293 = vadd.f32 %v291, %v292
    %vm294 = vcmask 385024
    %295 = vst.msk [vmem:[%s2] sm:$0x1] %vm294, %v293
    %v296 = vld [vmem:[#allocation3] sm:$0xff]
    %v297 = vsel %vm199, %v296, 0.0
    %v298 = vrot.slane %v297, 4
    %v299 = vadd.f32 %v297, %v298
    %v300 = vrot.slane %v299, 2
    %v301 = vadd.f32 %v299, %v300
    %v302 = vrot.slane %v301, 1
    %v303 = vadd.f32 %v301, %v302
    %304 = vst.msk [vmem:[%s2 + $0x1] sm:$0x1] %vm294, %v303
    %v305 = vld [vmem:[#allocation4] sm:$0xff]
    %v306 = vsel %vm199, %v305, 0.0
    %v307 = vrot.slane %v306, 4
    %v308 = vadd.f32 %v306, %v307
    %v309 = vrot.slane %v308, 2
    %v310 = vadd.f32 %v308, %v309
    %v311 = vrot.slane %v310, 1
    %v312 = vadd.f32 %v310, %v311
    %313 = vst.msk [vmem:[%s2 + $0x2] sm:$0x1] %vm294, %v312
  $region17: #{_forward_impl.2} parent=0 // pred_fallthru
    _
  // Predicated region
  $region18: #{_forward_impl.2} parent=0 // pred_check
    _
  $region19: #{_forward_impl.2} parent=0 // pred_check_branch
    %315 = sbr.rel (0) target = $region21
  $region20: #{_forward_impl.2} parent=0 // pred_region
    _
  $region21: #{_forward_impl.2} parent=0 // pred_fallthru
    _
  // Predicated region
  $region22: #{_forward_impl.2} parent=0 // pred_check
    _
  $region23: #{_forward_impl.2} parent=0 // pred_check_branch
    %317 = sbr.rel (0) target = $region25
  $region24: #{_forward_impl.2} parent=0 // pred_region
    _
  $region25: #{_forward_impl.2} parent=0 // pred_fallthru
    _

</llo_original>
